<compile_context>
chip_gen: v7x
topology: tpu7x:2x2x1
jax: 0.10.0
libtpu: 0.0.40
codegen_flags: <defaults>
</compile_context>

<pallas_src>
import math

import jax
import jax.numpy as jnp
from jax.experimental import pallas as pl
from jax.experimental.pallas import tpu as pltpu


def _round_up(x, m):
    return ((x + m - 1) // m) * m


def _pad2d(a, rows, cols, dtype):
    """Zero-pad a 2D array to (rows, cols); no-op when already that shape."""
    a = a.astype(dtype)
    if a.shape == (rows, cols):
        return a
    return jnp.zeros((rows, cols), dtype).at[: a.shape[0], : a.shape[1]].set(a)


# -------------------- Pass 1: support = X @ W (computed once) --------------------
def _support_kernel(x_ref, w_ref, o_ref):
    o_ref[...] = jnp.dot(
        x_ref[...], w_ref[...], preferred_element_type=jnp.float32
    ).astype(o_ref.dtype)


# ------------- Pass 2: out = adj @ support (+ bias), K-tiled accumulate -------------
def _agg_bias_kernel(adj_ref, s_ref, b_ref, o_ref, acc_ref):
    k = pl.program_id(2)

    @pl.when(k == 0)
    def _():
        acc_ref[...] = jnp.zeros_like(acc_ref)

    acc_ref[...] += jnp.dot(
        adj_ref[...], s_ref[...], preferred_element_type=jnp.float32
    )

    @pl.when(k == pl.num_programs(2) - 1)
    def _():
        o_ref[...] = (acc_ref[...] + b_ref[...]).astype(o_ref.dtype)


def _agg_kernel(adj_ref, s_ref, o_ref, acc_ref):
    k = pl.program_id(2)

    @pl.when(k == 0)
    def _():
        acc_ref[...] = jnp.zeros_like(acc_ref)

    acc_ref[...] += jnp.dot(
        adj_ref[...], s_ref[...], preferred_element_type=jnp.float32
    )

    @pl.when(k == pl.num_programs(2) - 1)
    def _():
        o_ref[...] = acc_ref[...].astype(o_ref.dtype)


def graph_convolution(x, weight, adj, bias=None, *, tm=512, tk=1024, tn=512):
    """GCN layer: adj @ (x @ weight) [+ bias].

    x: [N, Fin], weight: [Fin, Fout], adj: [N, N] (dense), bias: [Fout] or None.
    tm: adj/output row tile; tk: contraction (adj col / support row) tile;
    tn: output-feature tile.  All clamped to the padded problem size.
    """
    N, Fin = x.shape
    Fin_w, Fout = weight.shape
    assert Fin_w == Fin, "weight rows must match input features"
    assert adj.shape == (N, N), "adj must be square [N, N]"
    out_dtype = x.dtype

    # Lane-dense feature dim -> unmasked vector stores.
    Fout_p = _round_up(Fout, 128)
    # Clamp tiles to the 128-aligned problem size, then pad each adj axis so
    # the grid divides exactly (supports ragged N; padded rows/cols are zero).
    n128 = _round_up(N, 128)
    tm_e = min(tm, n128)            # adj / output row tile       (mult of 8)
    tk_e = min(tk, n128)            # adj col / support row tile  (mult of 128)
    tn_e = min(tn, Fout_p)          # output feature tile         (mult of 128)
    Nr = _round_up(N, tm_e)         # padded output rows
    Nc = _round_up(N, tk_e)         # padded contraction extent

    x_p = _pad2d(x, Nc, Fin, out_dtype)
    w_p = _pad2d(weight, Fin, Fout_p, out_dtype)
    adj_p = _pad2d(adj, Nr, Nc, out_dtype)

    # ---------------- Pass 1: support = X @ W ----------------
    support = pl.pallas_call(
        _support_kernel,
        out_shape=jax.ShapeDtypeStruct((Nc, Fout_p), out_dtype),
        grid_spec=pltpu.PrefetchScalarGridSpec(
            num_scalar_prefetch=0,
            grid=(Nc // tk_e, Fout_p // tn_e),
            in_specs=[
                pl.BlockSpec((tk_e, Fin), lambda i, j: (i, 0)),     # X row-tile
                pl.BlockSpec((Fin, tn_e), lambda i, j: (0, j)),     # W col-tile
            ],
            out_specs=pl.BlockSpec((tk_e, tn_e), lambda i, j: (i, j)),
        ),
        compiler_params=pltpu.CompilerParams(
            dimension_semantics=("parallel", "parallel"),
        ),
    )(x_p, w_p)

    # ---------------- Pass 2: out = adj @ support (+ bias) ----------------
    grid = (Nr // tm_e, Fout_p // tn_e, Nc // tk_e)
    adj_spec = pl.BlockSpec((tm_e, tk_e), lambda i, j, k: (i, k))
    sup_spec = pl.BlockSpec((tk_e, tn_e), lambda i, j, k: (k, j))
    out_spec = pl.BlockSpec((tm_e, tn_e), lambda i, j, k: (i, j))
    scratch = [pltpu.VMEM((tm_e, tn_e), jnp.float32)]
    cparams = pltpu.CompilerParams(
        dimension_semantics=("parallel", "parallel", "arbitrary"),
    )
    out_shape = jax.ShapeDtypeStruct((Nr, Fout_p), out_dtype)

    if bias is not None:
        b_p = _pad2d(bias.reshape(1, Fout), 1, Fout_p, out_dtype)
        out_p = pl.pallas_call(
            _agg_bias_kernel,
            out_shape=out_shape,
            grid_spec=pltpu.PrefetchScalarGridSpec(
                num_scalar_prefetch=0,
                grid=grid,
                in_specs=[
                    adj_spec,
                    sup_spec,
                    pl.BlockSpec((1, tn_e), lambda i, j, k: (0, j)),
                ],
                out_specs=out_spec,
                scratch_shapes=scratch,
            ),
            compiler_params=cparams,
        )(adj_p, support, b_p)
    else:
        out_p = pl.pallas_call(
            _agg_kernel,
            out_shape=out_shape,
            grid_spec=pltpu.PrefetchScalarGridSpec(
                num_scalar_prefetch=0,
                grid=grid,
                in_specs=[adj_spec, sup_spec],
                out_specs=out_spec,
                scratch_shapes=scratch,
            ),
            compiler_params=cparams,
        )(adj_p, support)

    return out_p[:N, :Fout]


if __name__ == "__main__":
    key = jax.random.PRNGKey(0)
    k_case1, k_case2 = jax.random.split(key)

    def make_case(k, N, Fin, Fout):
        k_x, k_adj, k_w, k_b = jax.random.split(k, 4)
        x = jax.random.normal(k_x, (N, Fin), dtype=jnp.float32)
        adj = jax.random.uniform(k_adj, (N, N), dtype=jnp.float32)
        adj = adj / jnp.sum(adj, axis=1, keepdims=True)  # row-normalized dense adjacency
        stdv = 1.0 / math.sqrt(Fout)                     # matches reset_parameters()
        w = jax.random.uniform(k_w, (Fin, Fout), dtype=jnp.float32,
                               minval=-stdv, maxval=stdv)
        b = jax.random.uniform(k_b, (Fout,), dtype=jnp.float32,
                               minval=-stdv, maxval=stdv)
        return x, adj, w, b

    # Case 1: aligned shapes, with bias.
    x, adj, weight, bias = make_case(k_case1, 128, 32, 64)
    out = jax.block_until_ready(graph_convolution(x, weight, adj, bias))
    ref = jnp.dot(adj, jnp.dot(x, weight, precision="highest"),
                  precision="highest") + bias
    assert out.shape == ref.shape
    assert jnp.allclose(out, ref, atol=1e-4, rtol=1e-4), "mismatch vs reference (bias)"

    # Case 2: ragged shapes (exercises padding path), no bias.
    x2, adj2, weight2, _ = make_case(k_case2, 200, 48, 80)
    out2 = jax.block_until_ready(graph_convolution(x2, weight2, adj2, None))
    ref2 = jnp.dot(adj2, jnp.dot(x2, weight2, precision="highest"),
                   precision="highest")
    assert out2.shape == ref2.shape
    assert jnp.allclose(out2, ref2, atol=1e-4, rtol=1e-4), "mismatch vs reference (no bias)"

    print("KERNEL_OK")
</pallas_src>

<mosaic_0001>
module attributes {stable_mosaic.version = 11 : i64} {
  func.func @_support_kernel(%arg0: i32, %arg1: i32, %arg2: memref<128x32xf32, #tpu.memory_space<vmem>>, %arg3: memref<32x128xf32, #tpu.memory_space<vmem>>, %arg4: memref<128x128xf32, #tpu.memory_space<vmem>>) attributes {dimension_semantics = [#tpu.dimension_semantics<parallel>, #tpu.dimension_semantics<parallel>], iteration_bounds = array<i64: 1, 1>, scalar_prefetch = 0 : i64, scratch_operands = 0 : i64, tpu.core_type = #tpu.core_type<tc>, window_params = [{transform_indices = @transform_0, window_bounds = array<i64: 128, 32>}, {transform_indices = @transform_1, window_bounds = array<i64: 32, 128>}, {transform_indices = @transform_2, window_bounds = array<i64: 128, 128>}]} {
    %c0 = arith.constant 0 : index
    %c0_0 = arith.constant 0 : index
    %0 = vector.load %arg2[%c0, %c0_0] : memref<128x32xf32, #tpu.memory_space<vmem>>, vector<128x32xf32>
    %c0_1 = arith.constant 0 : index
    %c0_2 = arith.constant 0 : index
    %1 = vector.load %arg3[%c0_1, %c0_2] : memref<32x128xf32, #tpu.memory_space<vmem>>, vector<32x128xf32>
    %cst = arith.constant dense<0.000000e+00> : vector<128x128xf32>
    %2 = tpu.matmul %0, %1, %cst {dimension_numbers = #tpu.dot_dimension_numbers<[1], [0], [0], [1], [0, 0, 1, 1], [], []>} : vector<128x32xf32>, vector<32x128xf32>, vector<128x128xf32> -> vector<128x128xf32>
    %c0_3 = arith.constant 0 : index
    %c0_4 = arith.constant 0 : index
    %3 = vector.load %arg4[%c0_3, %c0_4] : memref<128x128xf32, #tpu.memory_space<vmem>>, vector<128x128xf32>
    tpu.vector_store %arg4[%c0_3, %c0_4], %2 {strides = array<i32>} : memref<128x128xf32, #tpu.memory_space<vmem>>, vector<128x128xf32>,
    return
  }
  func.func @transform_0(%arg0: i32, %arg1: i32) -> (i32, i32) {
    %c0_i32 = arith.constant 0 : i32
    %c0_i32_0 = arith.constant 0 : i32
    return %arg0, %c0_i32 : i32, i32
  }
  func.func @transform_1(%arg0: i32, %arg1: i32) -> (i32, i32) {
    %c0_i32 = arith.constant 0 : i32
    %c0_i32_0 = arith.constant 0 : i32
    return %c0_i32, %arg1 : i32, i32
  }
  func.func @transform_2(%arg0: i32, %arg1: i32) -> (i32, i32) {
    %c0_i32 = arith.constant 0 : i32
    return %arg0, %arg1 : i32, i32
  }
}

</mosaic_0001>

<llo_original>
// kernel: tpu_custom_call.1
$region0: #{tpu_custom_call.1}
  #allocation0 [shape = 'u32[]', space=smem, size = 0x4, offset = 0x4, fixed_abs, tag = 'smem constant byte address 0x4 - core index']
  #allocation1 [shape = 'u32[144,128]{1,0:T(1,128)}', space=vmem, size = 0x12000, scoped, tag = 'internal scratch']
  %s0 = inlined_call_operand.vmem [shape: f32[128,32], index: 0, kind: input, shape index: {}]
  %s1 = inlined_call_operand.vmem [shape: f32[32,128], index: 1, kind: input, shape index: {}]
  %s2 = inlined_call_operand.hbm [shape: f32[128,128], index: 2, kind: output, shape index: {}]
  %s3 = sld [smem:[#allocation0]]
  $region18: #{tpu_custom_call.1} parent=0
    _
  %s5 = ssub.s32 1, %s3
  %s6 = scalar_select 0, %s5, %s3
  $region1: #{tpu_custom_call.1} parent=0
    #allocation2 [shape = 'u8[65536]{0}', space=vmem, size = 0x10000, scoped, tag = 'output window, operand 0, single buffered']
    #allocation3 [shape = 's32[1]{0}', space=sflag, size = 0x4, scoped, tag = 'scoped memory for tpu_custom_call.1']
    %7 = vsyncpa [#allocation3], 0
    // Predicated region
    $region2: #{tpu_custom_call.1} parent=1 // pred_check
      _
    $region3: #{tpu_custom_call.1} parent=1 // pred_check_branch
      %9 = sbr.rel (0) target = $region5
    $region4: #{tpu_custom_call.1} parent=1 // pred_region
      _
    $region5: #{tpu_custom_call.1} parent=1 // pred_fallthru
      _
    // Predicated region
    $region6: #{tpu_custom_call.1} parent=1 // pred_check
      _
    $region7: #{tpu_custom_call.1} parent=1 // pred_check_branch
      %11 = sbr.rel (0) target = $region9
    $region8: #{tpu_custom_call.1} parent=1 // pred_region
      _
    $region9: #{tpu_custom_call.1} parent=1 // pred_fallthru
      _
    %v12 = vld [vmem:[%s0] sm:$0xff]
    %v13 = vld [vmem:[%s0 + $0x8] sm:$0xff]
    %v14 = vld [vmem:[%s0 + $0x10] sm:$0xff]
    %v15 = vld [vmem:[%s0 + $0x18] sm:$0xff]
    %v16 = vld [vmem:[%s0 + $0x20] sm:$0xff]
    %v17 = vld [vmem:[%s0 + $0x28] sm:$0xff]
    %v18 = vld [vmem:[%s0 + $0x30] sm:$0xff]
    %v19 = vld [vmem:[%s0 + $0x38] sm:$0xff]
    %v20 = vld [vmem:[%s0 + $0x40] sm:$0xff]
    %v21 = vld [vmem:[%s0 + $0x48] sm:$0xff]
    %v22 = vld [vmem:[%s0 + $0x50] sm:$0xff]
    %v23 = vld [vmem:[%s0 + $0x58] sm:$0xff]
    %v24 = vld [vmem:[%s0 + $0x60] sm:$0xff]
    %v25 = vld [vmem:[%s0 + $0x68] sm:$0xff]
    %v26 = vld [vmem:[%s0 + $0x70] sm:$0xff]
    %v27 = vld [vmem:[%s0 + $0x78] sm:$0xff]
    %v28 = vld [vmem:[%s1] sm:$0xff]
    %v29 = vld [vmem:[%s1 + $0x8] sm:$0xff]
    %v30 = vld [vmem:[%s1 + $0x10] sm:$0xff]
    %v31 = vld [vmem:[%s1 + $0x18] sm:$0xff]
    %vm32 = vcmask 261120
    %v34 = vsel %vm32, %v12, 0
    %v37 = vsel %vm32, %v13, 0
    %v40 = vsel %vm32, %v14, 0
    %v43 = vsel %vm32, %v15, 0
    %v46 = vsel %vm32, %v16, 0
    %v49 = vsel %vm32, %v17, 0
    %v52 = vsel %vm32, %v18, 0
    %v55 = vsel %vm32, %v19, 0
    %v58 = vsel %vm32, %v20, 0
    %v61 = vsel %vm32, %v21, 0
    %v64 = vsel %vm32, %v22, 0
    %v67 = vsel %vm32, %v23, 0
    %v70 = vsel %vm32, %v24, 0
    %v73 = vsel %vm32, %v25, 0
    %v76 = vsel %vm32, %v26, 0
    %v79 = vsel %vm32, %v27, 0
    %81 = vmatprep.subr.mxu0 0.0
    %82 = vmatpush1.msra.mxu0 %v28
    %83 = vmatprep.subr.mxu0 0.0
    %84 = vmatpush1.msra.mxu0 %v29
    %85 = vmatprep.subr.mxu0 0.0
    %86 = vmatpush1.msra.mxu0 %v30
    %87 = vmatprep.subr.mxu0 0.0
    %88 = vmatpush1.msra.mxu0 %v31
    %89 = vmatprep.subr.mxu0 0.0
    %90 = vmatpush1.msra.mxu0 0.0
    %91 = vmatprep.subr.mxu0 0.0
    %92 = vmatpush1.msra.mxu0 0.0
    %93 = vmatprep.subr.mxu0 0.0
    %94 = vmatpush1.msra.mxu0 0.0
    %95 = vmatprep.subr.mxu0 0.0
    %96 = vmatpush1.msra.mxu0 0.0
    %97 = vmatprep.subr.mxu0 0.0
    %98 = vmatpush1.msra.mxu0 0.0
    %99 = vmatprep.subr.mxu0 0.0
    %100 = vmatpush1.msra.mxu0 0.0
    %101 = vmatprep.subr.mxu0 0.0
    %102 = vmatpush1.msra.mxu0 0.0
    %103 = vmatprep.subr.mxu0 0.0
    %104 = vmatpush1.msra.mxu0 0.0
    %105 = vmatprep.subr.mxu0 0.0
    %106 = vmatpush1.msra.mxu0 0.0
    %107 = vmatprep.subr.mxu0 0.0
    %108 = vmatpush1.msra.mxu0 0.0
    %109 = vmatprep.subr.mxu0 0.0
    %110 = vmatpush1.msra.mxu0 0.0
    %111 = vmatprep.subr.mxu0 0.0
    %112 = vmatpush1.msra.mxu0 0.0
    %113 = vmatprep.subr.mxu0 0.0
    %114 = vmatpush1.msra.mxu0 0.0
    %115 = vmatprep.subr.mxu0 0.0
    %116 = vmatpush1.msra.mxu0 0.0
    %117 = vmatprep.subr.mxu0 0.0
    %118 = vmatpush1.msra.mxu0 0.0
    %119 = vmatprep.subr.mxu0 0.0
    %120 = vmatpush1.msra.mxu0 0.0
    %121 = vmatprep.subr.mxu0 0.0
    %122 = vmatpush1.msra.mxu0 0.0
    %123 = vmatprep.subr.mxu0 0.0
    %124 = vmatpush1.msra.mxu0 0.0
    %125 = vmatprep.subr.mxu0 0.0
    %126 = vmatpush1.msra.mxu0 0.0
    %127 = vmatprep.subr.mxu0 0.0
    %128 = vmatpush1.msra.mxu0 0.0
    %129 = vmatprep.subr.mxu0 0.0
    %130 = vmatpush1.msra.mxu0 0.0
    %131 = vmatprep.subr.mxu0 0.0
    %132 = vmatpush1.msra.mxu0 0.0
    %133 = vmatprep.subr.mxu0 0.0
    %134 = vmatpush1.msra.mxu0 0.0
    %135 = vmatprep.subr.mxu0 0.0
    %136 = vmatpush1.msra.mxu0 0.0
    %137 = vmatprep.subr.mxu0 0.0
    %138 = vmatpush1.msra.mxu0 0.0
    %139 = vmatprep.subr.mxu0 0.0
    %140 = vmatpush1.msra.mxu0 0.0
    %141 = vmatprep.subr.mxu0 0.0
    %142 = vmatpush1.msra.mxu0 0.0
    %143 = vmatprep.subr.mxu0 0.0
    %144 = vmatpush1.msra.mxu0 0.0
    %145 = vmatprep.mubr.f32.mxu0 0.0
    %146 = vmatmul.mubr.f32.gmra.mrb[0].mxu0 %v34
    %v147 = vpop.f32.mrb[0].mxu0
    %v148 = vadd.f32 0.0, %v147
    %v149 = vpop.f32.mrb[0].mxu0
    %150 = vmatprep.mubr.f32.mxu0 0.0
    %151 = vmatmul.mubr.f32.gmra.mrb[0].mxu0 %v37
    %v152 = vpop.f32.mrb[0].mxu0
    %v153 = vadd.f32 0.0, %v152
    %v154 = vpop.f32.mrb[0].mxu0
    %155 = vmatprep.mubr.f32.mxu0 0.0
    %156 = vmatmul.mubr.f32.gmra.mrb[0].mxu0 %v40
    %v157 = vpop.f32.mrb[0].mxu0
    %v158 = vadd.f32 0.0, %v157
    %v159 = vpop.f32.mrb[0].mxu0
    %160 = vmatprep.mubr.f32.mxu0 0.0
    %161 = vmatmul.mubr.f32.gmra.mrb[0].mxu0 %v43
    %v162 = vpop.f32.mrb[0].mxu0
    %v163 = vadd.f32 0.0, %v162
    %v164 = vpop.f32.mrb[0].mxu0
    %165 = vmatprep.mubr.f32.mxu0 0.0
    %166 = vmatmul.mubr.f32.gmra.mrb[0].mxu0 %v46
    %v167 = vpop.f32.mrb[0].mxu0
    %v168 = vadd.f32 0.0, %v167
    %v169 = vpop.f32.mrb[0].mxu0
    %170 = vmatprep.mubr.f32.mxu0 0.0
    %171 = vmatmul.mubr.f32.gmra.mrb[0].mxu0 %v49
    %v172 = vpop.f32.mrb[0].mxu0
    %v173 = vadd.f32 0.0, %v172
    %v174 = vpop.f32.mrb[0].mxu0
    %175 = vmatprep.mubr.f32.mxu0 0.0
    %176 = vmatmul.mubr.f32.gmra.mrb[0].mxu0 %v52
    %v177 = vpop.f32.mrb[0].mxu0
    %v178 = vadd.f32 0.0, %v177
    %v179 = vpop.f32.mrb[0].mxu0
    %180 = vmatprep.mubr.f32.mxu0 0.0
    %181 = vmatmul.mubr.f32.gmra.mrb[0].mxu0 %v55
    %v182 = vpop.f32.mrb[0].mxu0
    %v183 = vadd.f32 0.0, %v182
    %v184 = vpop.f32.mrb[0].mxu0
    %185 = vmatprep.mubr.f32.mxu0 0.0
    %186 = vmatmul.mubr.f32.gmra.mrb[0].mxu0 %v58
    %v187 = vpop.f32.mrb[0].mxu0
    %v188 = vadd.f32 0.0, %v187
    %v189 = vpop.f32.mrb[0].mxu0
    %190 = vmatprep.mubr.f32.mxu0 0.0
    %191 = vmatmul.mubr.f32.gmra.mrb[0].mxu0 %v61
    %v192 = vpop.f32.mrb[0].mxu0
    %v193 = vadd.f32 0.0, %v192
    %v194 = vpop.f32.mrb[0].mxu0
    %195 = vmatprep.mubr.f32.mxu0 0.0
    %196 = vmatmul.mubr.f32.gmra.mrb[0].mxu0 %v64
    %v197 = vpop.f32.mrb[0].mxu0
    %v198 = vadd.f32 0.0, %v197
    %v199 = vpop.f32.mrb[0].mxu0
    %200 = vmatprep.mubr.f32.mxu0 0.0
    %201 = vmatmul.mubr.f32.gmra.mrb[0].mxu0 %v67
    %v202 = vpop.f32.mrb[0].mxu0
    %v203 = vadd.f32 0.0, %v202
    %v204 = vpop.f32.mrb[0].mxu0
    %205 = vmatprep.mubr.f32.mxu0 0.0
    %206 = vmatmul.mubr.f32.gmra.mrb[0].mxu0 %v70
    %v207 = vpop.f32.mrb[0].mxu0
    %v208 = vadd.f32 0.0, %v207
    %v209 = vpop.f32.mrb[0].mxu0
    %210 = vmatprep.mubr.f32.mxu0 0.0
    %211 = vmatmul.mubr.f32.gmra.mrb[0].mxu0 %v73
    %v212 = vpop.f32.mrb[0].mxu0
    %v213 = vadd.f32 0.0, %v212
    %v214 = vpop.f32.mrb[0].mxu0
    %215 = vmatprep.mubr.f32.mxu0 0.0
    %216 = vmatmul.mubr.f32.gmra.mrb[0].mxu0 %v76
    %v217 = vpop.f32.mrb[0].mxu0
    %v218 = vadd.f32 0.0, %v217
    %v219 = vpop.f32.mrb[0].mxu0
    %220 = vmatprep.mubr.f32.mxu0 0.0
    %221 = vmatmul.mubr.f32.gmra.mrb[0].mxu0 %v79
    %v222 = vpop.f32.mrb[0].mxu0
    %v223 = vadd.f32 0.0, %v222
    %v224 = vpop.f32.mrb[0].mxu0
    %225 = vdwg.mxu0
    %226 = vst [vmem:[#allocation2] sm:$0xff] %v148
    %227 = vst [vmem:[#allocation2 + $0x8] sm:$0xff] %v153
    %228 = vst [vmem:[#allocation2 + $0x10] sm:$0xff] %v158
    %229 = vst [vmem:[#allocation2 + $0x18] sm:$0xff] %v163
    %230 = vst [vmem:[#allocation2 + $0x20] sm:$0xff] %v168
    %231 = vst [vmem:[#allocation2 + $0x28] sm:$0xff] %v173
    %232 = vst [vmem:[#allocation2 + $0x30] sm:$0xff] %v178
    %233 = vst [vmem:[#allocation2 + $0x38] sm:$0xff] %v183
    %234 = vst [vmem:[#allocation2 + $0x40] sm:$0xff] %v188
    %235 = vst [vmem:[#allocation2 + $0x48] sm:$0xff] %v193
    %236 = vst [vmem:[#allocation2 + $0x50] sm:$0xff] %v198
    %237 = vst [vmem:[#allocation2 + $0x58] sm:$0xff] %v203
    %238 = vst [vmem:[#allocation2 + $0x60] sm:$0xff] %v208
    %239 = vst [vmem:[#allocation2 + $0x68] sm:$0xff] %v213
    %240 = vst [vmem:[#allocation2 + $0x70] sm:$0xff] %v218
    %241 = vst [vmem:[#allocation2 + $0x78] sm:$0xff] %v223
    // Predicated region
    $region10: #{tpu_custom_call.1} parent=1 // pred_check
      _
    $region11: #{tpu_custom_call.1} parent=1 // pred_check_branch
      %243 = sbr.rel (0) target = $region13
    $region12: #{tpu_custom_call.1} parent=1 // pred_region
      %s245 = ssub.s32 2048, 2048
      %246 = vsyncadd [#allocation3], %s245
      %s247 = sshll.u32 [#allocation2], 4
      %s248 = int_to_ptr.vmem [resolvable:$true] %s247
      %253 = dma.vmem_to_hbm [thread:$0]  %s248, 2048, %s2, [#allocation3], 128, 128, 8
    $region13: #{tpu_custom_call.1} parent=1 // pred_fallthru
      _
    // Predicated region
    $region14: #{tpu_custom_call.1} parent=1 // pred_check
      _
    $region15: #{tpu_custom_call.1} parent=1 // pred_check_branch
      %255 = sbr.rel (0) target = $region17
    $region16: #{tpu_custom_call.1} parent=1 // pred_region
      %256 = dma.done [#allocation3], 2048
    $region17: #{tpu_custom_call.1} parent=1 // pred_fallthru
      _
    %257 = vsyncpa [#allocation3], 1

</llo_original>
